<compile_context>
chip_gen: v5e
topology: v5e:2x2
jax: 0.10.0
libtpu: 0.0.40
codegen_flags: <defaults>
</compile_context>

<pallas_src>
import jax
import jax.numpy as jnp
from jax.experimental import pallas as pl
from jax.experimental.pallas import tpu as pltpu


def _share_sep_conv_kernel(w_ref, x_ref, o_ref, xpad_ref):
    """Depthwise conv of B (H, W) planes with one shared (k, k) kernel.

    w_ref    : (k, k) shared weight, f32, SMEM (scalar reads)
    x_ref    : (B, H, W) input planes, VMEM
    o_ref    : (B, H, W) output planes, VMEM
    xpad_ref : (B, H + 2p, W + 2p) zero-padded slab, VMEM scratch
    """
    k = w_ref.shape[0]
    p = (k - 1) // 2
    B, H, W = o_ref.shape
    _, Hp, Wp = xpad_ref.shape

    # Zero only the halo strips; the interior is fully overwritten below, so a
    # full-slab memset would only burn the narrow vector-store slot.
    if p > 0:
        row_zeros = jnp.zeros((B, p, Wp), xpad_ref.dtype)
        xpad_ref[:, 0:p, :] = row_zeros
        xpad_ref[:, p + H:Hp, :] = row_zeros
        col_zeros = jnp.zeros((B, H, p), xpad_ref.dtype)
        xpad_ref[:, p:p + H, 0:p] = col_zeros
        xpad_ref[:, p:p + H, p + W:Wp] = col_zeros
    xpad_ref[:, p:p + H, p:p + W] = x_ref[...].astype(xpad_ref.dtype)

    # Cross-correlation (PyTorch F.conv2d semantics):
    #   out[h, w] = sum_{i, j} weight[i, j] * x_pad[h + i, w + j]
    # First tap initializes the accumulator (f32: SMEM weight scalar is f32,
    # so 16-bit slabs still accumulate in f32).
    # TODO(synk): on v7x / k>=5, move the W-direction taps onto the MXU via a
    # banded (Wp, W) matrix; on v6e route lane shifts through pltpu.roll.
    acc = w_ref[0, 0] * xpad_ref[:, 0:H, 0:W]
    for i in range(k):                      # static unroll, k*k taps
        for j in range(k):
            if i == 0 and j == 0:
                continue
            acc = acc + w_ref[i, j] * xpad_ref[:, i:i + H, j:j + W]
    o_ref[...] = acc.astype(o_ref.dtype)


def _round_up(x, m):
    return ((x + m - 1) // m) * m


def _vmem_limit_bytes():
    """Generation-aware VMEM limit: ~3/4 of per-core capacity, capped."""
    cap = 64 * 1024 * 1024
    try:
        cap = int(getattr(pltpu.get_tpu_info(), "vmem_capacity_bytes", cap)) or cap
    except Exception:
        pass
    return min((cap * 3) // 4, 100 * 1024 * 1024)


def _pick_planes_per_step(nc, h, w, io_itemsize, scratch_itemsize, k, vmem_limit):
    """Planes per grid step: respects VMEM layout padding (lane dim -> 128,
    sublane dim -> 8), targets ~2 MiB input DMA blocks, and keeps enough grid
    steps for double-buffer overlap and v7x megacore sharding."""
    p = (k - 1) // 2
    hp, wp = h + 2 * p, w + 2 * p
    plane_io = _round_up(h, 8) * _round_up(w, 128) * io_itemsize
    plane_pad = _round_up(hp, 8) * _round_up(wp, 128) * scratch_itemsize
    plane_f32 = _round_up(h, 8) * _round_up(w, 128) * 4
    # double-buffered in + out blocks + padded slab + ~2 f32 accumulator temps
    per_plane = 2 * 2 * plane_io + plane_pad + 2 * plane_f32

    budget = vmem_limit // 2                  # headroom for compiler temporaries
    if per_plane > budget:
        # TODO(synk): row-tile H with a (k-1)-row halo for very large planes.
        raise NotImplementedError(
            "a single (H, W) plane does not fit the VMEM budget; "
            "H row-tiling is not implemented")

    b = max(1, min(nc, budget // per_plane))
    # ~2 MiB input blocks already reach ~85% of the HBM roofline.
    b = min(b, max(1, (2 * 1024 * 1024) // plane_io))
    # Keep >= 8-16 grid steps when possible (pipelining; 2 TCs on v7x).
    min_steps = 16 if nc >= 16 else (8 if nc >= 8 else (2 if nc >= 2 else 1))
    b = min(b, max(1, nc // min_steps))
    b = max(b, 1)
    while nc % b:                             # block count must divide plane axis
        b -= 1
    return b


def share_sep_conv(x, weight):
    """x: (N, C, H, W), weight: (k, k).  Depthwise conv2d of every channel with
    the same k x k kernel (stride 1, zero padding (k-1)//2, groups=C)."""
    N, C, H, W = x.shape
    k = weight.shape[0]
    assert weight.shape == (k, k)
    assert k % 2 == 1, "kernel size should be odd"
    p = (k - 1) // 2
    nc = N * C

    x_flat = x.reshape(nc, H, W)              # pure reshape: no HBM pass
    w_f32 = weight.astype(jnp.float32)        # SMEM scalars; f32 accumulation

    # 16-bit float I/O keeps the padded slab in 16-bit (halves scratch VMEM and
    # tap-load bytes on v6e/v7x); everything else pads in f32.
    if jnp.issubdtype(x.dtype, jnp.floating) and x.dtype.itemsize == 2:
        scratch_dtype = x.dtype
    else:
        scratch_dtype = jnp.float32

    vmem_limit = _vmem_limit_bytes()
    B = _pick_planes_per_step(nc, H, W, x.dtype.itemsize,
                              jnp.dtype(scratch_dtype).itemsize, k, vmem_limit)

    flops = 2 * k * k * nc * H * W
    bytes_accessed = int(2 * nc * H * W * x.dtype.itemsize
                         + weight.size * weight.dtype.itemsize)

    # TODO(synk): for W far below 128 (masked lane stores) a lane-dense layout
    # (channels-last or folding W and part of H into the lane axis) would cut
    # store/VALU waste up to 8x; kept NCHW to avoid extra HBM transpose passes.
    out_flat = pl.pallas_call(
        _share_sep_conv_kernel,
        out_shape=jax.ShapeDtypeStruct((nc, H, W), x.dtype),
        grid=(nc // B,),
        in_specs=[
            # shared k x k weight: whole array, scalar memory
            pl.BlockSpec(memory_space=pltpu.MemorySpace.SMEM),
            # B unpadded (H, W) planes per grid step
            pl.BlockSpec((B, H, W), lambda n: (n, 0, 0)),
        ],
        out_specs=pl.BlockSpec((B, H, W), lambda n: (n, 0, 0)),
        scratch_shapes=[pltpu.VMEM((B, H + 2 * p, W + 2 * p), scratch_dtype)],
        compiler_params=pltpu.CompilerParams(
            dimension_semantics=("parallel",),
            vmem_limit_bytes=vmem_limit,
        ),
        cost_estimate=pl.CostEstimate(
            flops=flops, transcendentals=0, bytes_accessed=bytes_accessed),
    )(w_f32, x_flat)

    return out_flat.reshape(N, C, H, W)


def make_share_sep_conv_weight(kernel_size, dtype=jnp.float32):
    """Deterministic init matching ShareSepConv.__init__: delta at the center."""
    assert kernel_size % 2 == 1, "kernel size should be odd"
    w = jnp.zeros((kernel_size, kernel_size), dtype=dtype)
    c = (kernel_size - 1) // 2
    return w.at[c, c].set(1.0)


def _reference_depthwise(x, weight):
    """Pure-JAX reference: depthwise conv with shared weight (groups=C)."""
    N, C, H, W = x.shape
    k = weight.shape[0]
    p = (k - 1) // 2
    w = jnp.broadcast_to(weight[None, None].astype(jnp.float32),
                         (C, 1, k, k))                     # (O=C, I/g=1, k, k)
    out = jax.lax.conv_general_dilated(
        x.astype(jnp.float32), w, window_strides=(1, 1),
        padding=[(p, p), (p, p)],
        dimension_numbers=("NCHW", "OIHW", "NCHW"),
        feature_group_count=C,
    )
    return out.astype(x.dtype)


if __name__ == "__main__":
    key = jax.random.PRNGKey(0)
    kx, kw = jax.random.split(key)

    N, C, H, W = 2, 4, 16, 16
    kernel_size = 3
    x = jax.random.normal(kx, (N, C, H, W), dtype=jnp.float32)

    # (1) Module-faithful init: delta at the center (identity mapping).
    w_delta = make_share_sep_conv_weight(kernel_size)
    out = jax.block_until_ready(share_sep_conv(x, w_delta))
    ref = _reference_depthwise(x, w_delta)
    assert out.shape == (N, C, H, W)
    assert jnp.allclose(out, ref, atol=1e-5, rtol=1e-5)

    # (2) Random weight: exercises the halo / zero-padding path properly.
    w_rand = jax.random.normal(kw, (kernel_size, kernel_size), dtype=jnp.float32)
    out2 = jax.block_until_ready(share_sep_conv(x, w_rand))
    ref2 = _reference_depthwise(x, w_rand)
    assert jnp.allclose(out2, ref2, atol=1e-4, rtol=1e-4)

    # (3) Second small shape: k=5 (p=2) and N*C not a power of two.
    x3 = jax.random.normal(kx, (1, 3, 24, 40), dtype=jnp.float32)
    w3 = jax.random.normal(kw, (5, 5), dtype=jnp.float32)
    out3 = jax.block_until_ready(share_sep_conv(x3, w3))
    ref3 = _reference_depthwise(x3, w3)
    assert jnp.allclose(out3, ref3, atol=1e-4, rtol=1e-4)

    # (4) bf16 I/O path (16-bit padded slab), delta weight -> exact identity.
    xb = x.astype(jnp.bfloat16)
    out4 = jax.block_until_ready(share_sep_conv(xb, w_delta))
    assert out4.dtype == jnp.bfloat16
    assert jnp.allclose(out4.astype(jnp.float32), xb.astype(jnp.float32))

    print("KERNEL_OK")
</pallas_src>

<mosaic_0001>
module attributes {stable_mosaic.version = 11 : i64} {
  func.func @_share_sep_conv_kernel(%arg0: i32, %arg1: memref<3x3xf32, #tpu.memory_space<smem>>, %arg2: memref<1x16x16xf32, #tpu.memory_space<vmem>>, %arg3: memref<1x16x16xf32, #tpu.memory_space<vmem>>, %arg4: memref<1x18x18xf32, #tpu.memory_space<vmem>>) attributes {dimension_semantics = [#tpu.dimension_semantics<parallel>], iteration_bounds = array<i64: 8>, scalar_prefetch = 0 : i64, scratch_operands = 1 : i64, tpu.core_type = #tpu.core_type<tc>, window_params = [{transform_indices = @transform_0, window_bounds = array<i64: 3, 3>}, {transform_indices = @transform_1, window_bounds = array<i64: 1, 16, 16>}, {transform_indices = @transform_2, window_bounds = array<i64: 1, 16, 16>}]} {
    %cst = arith.constant 0.000000e+00 : f32
    %0 = vector.broadcast %cst : f32 to vector<1x1x18xf32>
    %c0 = arith.constant 0 : index
    %c0_0 = arith.constant 0 : index
    %c0_1 = arith.constant 0 : index
    %1 = vector.load %arg4[%c0, %c0_0, %c0_1] : memref<1x18x18xf32, #tpu.memory_space<vmem>>, vector<1x1x18xf32>
    tpu.vector_store %arg4[%c0, %c0_0, %c0_1], %0 {strides = array<i32>} : memref<1x18x18xf32, #tpu.memory_space<vmem>>, vector<1x1x18xf32>,
    %c0_2 = arith.constant 0 : index
    %c17 = arith.constant 17 : index
    %c0_3 = arith.constant 0 : index
    %2 = vector.load %arg4[%c0_2, %c17, %c0_3] : memref<1x18x18xf32, #tpu.memory_space<vmem>>, vector<1x1x18xf32>
    tpu.vector_store %arg4[%c0_2, %c17, %c0_3], %0 {strides = array<i32>} : memref<1x18x18xf32, #tpu.memory_space<vmem>>, vector<1x1x18xf32>,
    %cst_4 = arith.constant 0.000000e+00 : f32
    %3 = vector.broadcast %cst_4 : f32 to vector<1x16x1xf32>
    %c0_5 = arith.constant 0 : index
    %c1 = arith.constant 1 : index
    %c0_6 = arith.constant 0 : index
    %4 = vector.load %arg4[%c0_5, %c1, %c0_6] : memref<1x18x18xf32, #tpu.memory_space<vmem>>, vector<1x16x1xf32>
    tpu.vector_store %arg4[%c0_5, %c1, %c0_6], %3 {strides = array<i32>} : memref<1x18x18xf32, #tpu.memory_space<vmem>>, vector<1x16x1xf32>,
    %c0_7 = arith.constant 0 : index
    %c1_8 = arith.constant 1 : index
    %c17_9 = arith.constant 17 : index
    %5 = vector.load %arg4[%c0_7, %c1_8, %c17_9] : memref<1x18x18xf32, #tpu.memory_space<vmem>>, vector<1x16x1xf32>
    tpu.vector_store %arg4[%c0_7, %c1_8, %c17_9], %3 {strides = array<i32>} : memref<1x18x18xf32, #tpu.memory_space<vmem>>, vector<1x16x1xf32>,
    %c0_10 = arith.constant 0 : index
    %c0_11 = arith.constant 0 : index
    %c0_12 = arith.constant 0 : index
    %6 = vector.load %arg2[%c0_10, %c0_11, %c0_12] : memref<1x16x16xf32, #tpu.memory_space<vmem>>, vector<1x16x16xf32>
    %c0_13 = arith.constant 0 : index
    %c1_14 = arith.constant 1 : index
    %c1_15 = arith.constant 1 : index
    %7 = vector.load %arg4[%c0_13, %c1_14, %c1_15] : memref<1x18x18xf32, #tpu.memory_space<vmem>>, vector<1x16x16xf32>
    tpu.vector_store %arg4[%c0_13, %c1_14, %c1_15], %6 {strides = array<i32>} : memref<1x18x18xf32, #tpu.memory_space<vmem>>, vector<1x16x16xf32>,
    %c0_16 = arith.constant 0 : index
    %c0_17 = arith.constant 0 : index
    %8 = memref.load %arg1[%c0_16, %c0_17] : memref<3x3xf32, #tpu.memory_space<smem>>
    %c0_18 = arith.constant 0 : index
    %c0_19 = arith.constant 0 : index
    %c0_20 = arith.constant 0 : index
    %9 = vector.load %arg4[%c0_18, %c0_19, %c0_20] : memref<1x18x18xf32, #tpu.memory_space<vmem>>, vector<1x16x16xf32>
    %10 = vector.broadcast %8 : f32 to vector<1x16x16xf32>
    %11 = arith.mulf %10, %9 : vector<1x16x16xf32>
    %c0_21 = arith.constant 0 : index
    %c1_22 = arith.constant 1 : index
    %12 = memref.load %arg1[%c0_21, %c1_22] : memref<3x3xf32, #tpu.memory_space<smem>>
    %c0_23 = arith.constant 0 : index
    %c0_24 = arith.constant 0 : index
    %c1_25 = arith.constant 1 : index
    %13 = vector.load %arg4[%c0_23, %c0_24, %c1_25] : memref<1x18x18xf32, #tpu.memory_space<vmem>>, vector<1x16x16xf32>
    %14 = vector.broadcast %12 : f32 to vector<1x16x16xf32>
    %15 = arith.mulf %14, %13 : vector<1x16x16xf32>
    %16 = arith.addf %11, %15 : vector<1x16x16xf32>
    %c0_26 = arith.constant 0 : index
    %c2 = arith.constant 2 : index
    %17 = memref.load %arg1[%c0_26, %c2] : memref<3x3xf32, #tpu.memory_space<smem>>
    %c0_27 = arith.constant 0 : index
    %c0_28 = arith.constant 0 : index
    %c2_29 = arith.constant 2 : index
    %18 = vector.load %arg4[%c0_27, %c0_28, %c2_29] : memref<1x18x18xf32, #tpu.memory_space<vmem>>, vector<1x16x16xf32>
    %19 = vector.broadcast %17 : f32 to vector<1x16x16xf32>
    %20 = arith.mulf %19, %18 : vector<1x16x16xf32>
    %21 = arith.addf %16, %20 : vector<1x16x16xf32>
    %c1_30 = arith.constant 1 : index
    %c0_31 = arith.constant 0 : index
    %22 = memref.load %arg1[%c1_30, %c0_31] : memref<3x3xf32, #tpu.memory_space<smem>>
    %c0_32 = arith.constant 0 : index
    %c1_33 = arith.constant 1 : index
    %c0_34 = arith.constant 0 : index
    %23 = vector.load %arg4[%c0_32, %c1_33, %c0_34] : memref<1x18x18xf32, #tpu.memory_space<vmem>>, vector<1x16x16xf32>
    %24 = vector.broadcast %22 : f32 to vector<1x16x16xf32>
    %25 = arith.mulf %24, %23 : vector<1x16x16xf32>
    %26 = arith.addf %21, %25 : vector<1x16x16xf32>
    %c1_35 = arith.constant 1 : index
    %c1_36 = arith.constant 1 : index
    %27 = memref.load %arg1[%c1_35, %c1_36] : memref<3x3xf32, #tpu.memory_space<smem>>
    %c0_37 = arith.constant 0 : index
    %c1_38 = arith.constant 1 : index
    %c1_39 = arith.constant 1 : index
    %28 = vector.load %arg4[%c0_37, %c1_38, %c1_39] : memref<1x18x18xf32, #tpu.memory_space<vmem>>, vector<1x16x16xf32>
    %29 = vector.broadcast %27 : f32 to vector<1x16x16xf32>
    %30 = arith.mulf %29, %28 : vector<1x16x16xf32>
    %31 = arith.addf %26, %30 : vector<1x16x16xf32>
    %c1_40 = arith.constant 1 : index
    %c2_41 = arith.constant 2 : index
    %32 = memref.load %arg1[%c1_40, %c2_41] : memref<3x3xf32, #tpu.memory_space<smem>>
    %c0_42 = arith.constant 0 : index
    %c1_43 = arith.constant 1 : index
    %c2_44 = arith.constant 2 : index
    %33 = vector.load %arg4[%c0_42, %c1_43, %c2_44] : memref<1x18x18xf32, #tpu.memory_space<vmem>>, vector<1x16x16xf32>
    %34 = vector.broadcast %32 : f32 to vector<1x16x16xf32>
    %35 = arith.mulf %34, %33 : vector<1x16x16xf32>
    %36 = arith.addf %31, %35 : vector<1x16x16xf32>
    %c2_45 = arith.constant 2 : index
    %c0_46 = arith.constant 0 : index
    %37 = memref.load %arg1[%c2_45, %c0_46] : memref<3x3xf32, #tpu.memory_space<smem>>
    %c0_47 = arith.constant 0 : index
    %c2_48 = arith.constant 2 : index
    %c0_49 = arith.constant 0 : index
    %38 = vector.load %arg4[%c0_47, %c2_48, %c0_49] : memref<1x18x18xf32, #tpu.memory_space<vmem>>, vector<1x16x16xf32>
    %39 = vector.broadcast %37 : f32 to vector<1x16x16xf32>
    %40 = arith.mulf %39, %38 : vector<1x16x16xf32>
    %41 = arith.addf %36, %40 : vector<1x16x16xf32>
    %c2_50 = arith.constant 2 : index
    %c1_51 = arith.constant 1 : index
    %42 = memref.load %arg1[%c2_50, %c1_51] : memref<3x3xf32, #tpu.memory_space<smem>>
    %c0_52 = arith.constant 0 : index
    %c2_53 = arith.constant 2 : index
    %c1_54 = arith.constant 1 : index
    %43 = vector.load %arg4[%c0_52, %c2_53, %c1_54] : memref<1x18x18xf32, #tpu.memory_space<vmem>>, vector<1x16x16xf32>
    %44 = vector.broadcast %42 : f32 to vector<1x16x16xf32>
    %45 = arith.mulf %44, %43 : vector<1x16x16xf32>
    %46 = arith.addf %41, %45 : vector<1x16x16xf32>
    %c2_55 = arith.constant 2 : index
    %c2_56 = arith.constant 2 : index
    %47 = memref.load %arg1[%c2_55, %c2_56] : memref<3x3xf32, #tpu.memory_space<smem>>
    %c0_57 = arith.constant 0 : index
    %c2_58 = arith.constant 2 : index
    %c2_59 = arith.constant 2 : index
    %48 = vector.load %arg4[%c0_57, %c2_58, %c2_59] : memref<1x18x18xf32, #tpu.memory_space<vmem>>, vector<1x16x16xf32>
    %49 = vector.broadcast %47 : f32 to vector<1x16x16xf32>
    %50 = arith.mulf %49, %48 : vector<1x16x16xf32>
    %51 = arith.addf %46, %50 : vector<1x16x16xf32>
    %c0_60 = arith.constant 0 : index
    %c0_61 = arith.constant 0 : index
    %c0_62 = arith.constant 0 : index
    %52 = vector.load %arg3[%c0_60, %c0_61, %c0_62] : memref<1x16x16xf32, #tpu.memory_space<vmem>>, vector<1x16x16xf32>
    tpu.vector_store %arg3[%c0_60, %c0_61, %c0_62], %51 {strides = array<i32>} : memref<1x16x16xf32, #tpu.memory_space<vmem>>, vector<1x16x16xf32>,
    return
  }
  func.func @transform_0(%arg0: i32) -> (i32, i32) {
    %c0_i32 = arith.constant 0 : i32
    %c0_i32_0 = arith.constant 0 : i32
    %c0_i32_1 = arith.constant 0 : i32
    return %c0_i32, %c0_i32_0 : i32, i32
  }
  func.func @transform_1(%arg0: i32) -> (i32, i32, i32) {
    %c0_i32 = arith.constant 0 : i32
    %c0_i32_0 = arith.constant 0 : i32
    %c0_i32_1 = arith.constant 0 : i32
    return %arg0, %c0_i32, %c0_i32_0 : i32, i32, i32
  }
  func.func @transform_2(%arg0: i32) -> (i32, i32, i32) {
    %c0_i32 = arith.constant 0 : i32
    %c0_i32_0 = arith.constant 0 : i32
    %c0_i32_1 = arith.constant 0 : i32
    return %arg0, %c0_i32, %c0_i32_0 : i32, i32, i32
  }
}

</mosaic_0001>

<llo_original>
// kernel: tpu_custom_call.1
$region0: #{tpu_custom_call.1}
  #allocation0 [shape = 'u32[]', space=smem, size = 0x4, offset = 0x4, fixed_abs, tag = 'smem constant byte address 0x4 - core index']
  #allocation1 [shape = 'u32[72,128]{1,0:T(1,128)}', space=vmem, size = 0x9000, scoped, tag = 'internal scratch']
  #allocation2 [shape = 'f32[1,18,18]{2,1,0:T(8,128)}', space=vmem, size = 0x3000, scoped, tag = 'scratch operand']
  %s0 = inlined_call_operand.hbm [shape: f32[3,3], index: 0, kind: input, shape index: {}]
  %s1 = inlined_call_operand.hbm [shape: f32[8,16,16], index: 1, kind: input, shape index: {}]
  %s2 = inlined_call_operand.hbm [shape: f32[8,16,16], index: 2, kind: output, shape index: {}]
  %s3 = sld [smem:[#allocation0]]
  $region49: #{tpu_custom_call.1} parent=0
    _
  %s5 = ssub.s32 1, %s3
  %s6 = scalar_select 0, %s5, %s3
  $region1: #{tpu_custom_call.1} parent=0
    #allocation3 [shape = 'u8[2048]{0}', space=smem, size = 0x800, scoped, tag = 'input window, operand 0, single buffered']
    #allocation4 [shape = 's32[2]{0}', space=sflag, size = 0x8, scoped, tag = 'scoped memory for tpu_custom_call.1']
    #allocation5 [shape = 's32[2]{0}', space=sflag, size = 0x8, scoped, tag = 'scoped memory for tpu_custom_call.1']
    #allocation6 [shape = 's32[2]{0}', space=sflag, size = 0x8, scoped, tag = 'scoped memory for tpu_custom_call.1']
    #allocation7 [shape = 'u8[16384]{0}', space=vmem, size = 0x4000, scoped, tag = 'input window, operand 1']
    #allocation8 [shape = 'u8[16384]{0}', space=vmem, size = 0x4000, scoped, tag = 'output window, operand 0']
    %7 = vsyncpa [#allocation6], 0
    %8 = vsyncpa [#allocation4], 0
    %s9 = scalar_lea.sflag [#allocation4], 1
    %10 = vsyncpa %s9, 0
    %11 = vsyncpa [#allocation5], 0
    %s12 = scalar_lea.sflag [#allocation5], 1
    %13 = vsyncpa %s12, 0
    loop: start=0, step=1, limit=10
    $region2: #{tpu_custom_call.1} parent=1 // loop_pre_header
      _
    $region3: #{tpu_custom_call.1} parent=1 // loop_header
      %s15 = sphi 0, %s19
      %p16 = scmp.ge.s32.totalorder %s15, 10
      %s23 = sphi 0, %s23
      %s25 = sphi 0, %s23
      %s26 = sphi 0, %s25
      %s40 = sphi 0, %s26
      %s46 = sphi 0, %s48
      %s49 = sphi 0, %s46
      %s50 = sphi 0, %s49
      %s66 = sphi 0, %s50
      %s72 = sphi 0, %s74
      %s75 = sphi 0, %s72
      %s76 = sphi 0, %s75
      %s92 = sphi 0, %s76
    $region4: #{tpu_custom_call.1} parent=1 // loop_header_branch
      %18 = sbr.rel (%p16) target = $region8
    $region5: #{tpu_custom_call.1} parent=1 // loop_body
      %s20 = ssub.s32 %s15, 1
      %s21 = ssub.s32 %s15, 2
      %s22 = sadd.s32 %s15, 1
      %s24 = sadd.s32 %s23, 1
      %p27 = scmp.eq.s32.totalorder %s15, 7
      %p28 = scmp.ne.s32.totalorder %s23, %s25
      %p29 = scmp.eq.s32.totalorder %s15, 0
      %p30 = por %p28, %p29
      %p31 = scmp.ne.s32.totalorder %s23, %s25
      %p32 = scmp.eq.s32.totalorder %s20, 7
      %p33 = por %p31, %p32
      %p34 = scmp.ne.s32.totalorder %s25, %s26
      %p35 = scmp.eq.s32.totalorder %s20, 0
      %p36 = por %p34, %p35
      %p37 = scmp.ne.s32.totalorder %s25, %s26
      %p38 = scmp.eq.s32.totalorder %s21, 7
      %p39 = por %p37, %p38
      %p41 = scmp.ne.s32.totalorder %s26, %s40
      %p42 = scmp.eq.s32.totalorder %s21, 0
      %p43 = por %p41, %p42
      %s44 = ssub.s32 %s15, %s22
      %p45 = scmp.eq.s32.totalorder %s44, 0
      %s47 = sadd.s32 %s46, 1
      %s48 = scalar_select %p45, %s46, %s47
      %p51 = pneg %p45
      %p52 = scmp.eq.s32.totalorder %s15, 7
      %p53 = por %p51, %p52
      %p54 = scmp.ne.s32.totalorder %s46, %s49
      %p55 = scmp.eq.s32.totalorder %s15, 0
      %p56 = por %p54, %p55
      %p57 = scmp.ne.s32.totalorder %s46, %s49
      %p58 = scmp.eq.s32.totalorder %s20, 7
      %p59 = por %p57, %p58
      %p60 = scmp.ne.s32.totalorder %s49, %s50
      %p61 = scmp.eq.s32.totalorder %s20, 0
      %p62 = por %p60, %p61
      %p63 = scmp.ne.s32.totalorder %s49, %s50
      %p64 = scmp.eq.s32.totalorder %s21, 7
      %p65 = por %p63, %p64
      %p67 = scmp.ne.s32.totalorder %s50, %s66
      %p68 = scmp.eq.s32.totalorder %s21, 0
      %p69 = por %p67, %p68
      %s70 = ssub.s32 %s15, %s22
      %p71 = scmp.eq.s32.totalorder %s70, 0
      %s73 = sadd.s32 %s72, 1
      %s74 = scalar_select %p71, %s72, %s73
      %p77 = pneg %p71
      %p78 = scmp.eq.s32.totalorder %s15, 7
      %p79 = por %p77, %p78
      %p80 = scmp.ne.s32.totalorder %s72, %s75
      %p81 = scmp.eq.s32.totalorder %s15, 0
      %p82 = por %p80, %p81
      %p83 = scmp.ne.s32.totalorder %s72, %s75
      %p84 = scmp.eq.s32.totalorder %s20, 7
      %p85 = por %p83, %p84
      %p86 = scmp.ne.s32.totalorder %s75, %s76
      %p87 = scmp.eq.s32.totalorder %s20, 0
      %p88 = por %p86, %p87
      %p89 = scmp.ne.s32.totalorder %s75, %s76
      %p90 = scmp.eq.s32.totalorder %s21, 7
      %p91 = por %p89, %p90
      %p93 = scmp.ne.s32.totalorder %s76, %s92
      %p94 = scmp.eq.s32.totalorder %s21, 0
      %p95 = por %p93, %p94
      %p96 = scmp.le.s32.totalorder 1, %s15
      %p97 = scmp.lt.s32.totalorder %s15, 9
      %p98 = pnand %p96, %p97
      %p99 = pneg %p98
      // Predicated region
      $region9: #{tpu_custom_call.1} parent=5 // pred_check
        _
      $region10: #{tpu_custom_call.1} parent=5 // pred_check_branch
        %101 = sbr.rel (%p98) target = $region12
      $region11: #{tpu_custom_call.1} parent=5 // pred_region
        %s102 = ssub.s32 %s15, 1
        // Predicated region
        $region13: #{tpu_custom_call.1} parent=11 // pred_check
          %p103 = pneg %p36
        $region14: #{tpu_custom_call.1} parent=11 // pred_check_branch
          %105 = sbr.rel (%p103) target = $region16
        $region15: #{tpu_custom_call.1} parent=11 // pred_region
          %107 = vsyncadd [#allocation6], 0
          %s109 = sshll.u32 %s0, 4
          %s110 = int_to_ptr.hbm [resolvable:$true] %s109
          %112 = dma.hbm_to_smem %s110, 64, [#allocation3], [#allocation6]
        $region16: #{tpu_custom_call.1} parent=11 // pred_fallthru
          _
      $region12: #{tpu_custom_call.1} parent=5 // pred_fallthru
        _
      %p113 = scmp.lt.s32.totalorder %s15, 8
      // Predicated region
      $region17: #{tpu_custom_call.1} parent=5 // pred_check
        %p114 = pneg %p113
      $region18: #{tpu_custom_call.1} parent=5 // pred_check_branch
        %116 = sbr.rel (%p114) target = $region20
      $region19: #{tpu_custom_call.1} parent=5 // pred_region
        // Predicated region
        $region21: #{tpu_custom_call.1} parent=19 // pred_check
          %p117 = pneg %p56
        $region22: #{tpu_custom_call.1} parent=19 // pred_check_branch
          %119 = sbr.rel (%p117) target = $region24
        $region23: #{tpu_custom_call.1} parent=19 // pred_region
          %s120 = sand.u32 %s46, 1
          %s121 = scalar_lea.sflag [#allocation4], %s120
          %s122 = sand.u32 %s46, 1
          %s123 = smul.addr %s122, 16
          %s124 = scalar_lea.vmem [#allocation7], %s123
          %126 = vsyncadd %s121, 0
          %s127 = smul.addr %s15, 2
          %s128 = smul.addr %s127, 8
          %s129 = scalar_lea.hbm %s1, %s128
          %s130 = sshll.u32 %s129, 4
          %s131 = int_to_ptr.hbm [resolvable:$true] %s130
          %s132 = sshll.u32 %s124, 4
          %s133 = int_to_ptr.vmem [resolvable:$true] %s132
          %138 = dma.hbm_to_vmem [thread:$0]  %s131, 256, %s133, %s121, 128, 128, 8
        $region24: #{tpu_custom_call.1} parent=19 // pred_fallthru
          _
      $region20: #{tpu_custom_call.1} parent=5 // pred_fallthru
        _
      %p139 = scmp.le.s32.totalorder 1, %s15
      %p140 = scmp.lt.s32.totalorder %s15, 9
      %p141 = pnand %p139, %p140
      %p142 = pneg %p141
      // Predicated region
      $region25: #{tpu_custom_call.1} parent=5 // pred_check
        _
      $region26: #{tpu_custom_call.1} parent=5 // pred_check_branch
        %144 = sbr.rel (%p141) target = $region28
      $region27: #{tpu_custom_call.1} parent=5 // pred_region
        %s145 = ssub.s32 %s15, 1
        // Predicated region
        $region29: #{tpu_custom_call.1} parent=27 // pred_check
          %p146 = pneg %p36
        $region30: #{tpu_custom_call.1} parent=27 // pred_check_branch
          %148 = sbr.rel (%p146) target = $region32
        $region31: #{tpu_custom_call.1} parent=27 // pred_region
          %150 = dma.done [#allocation6], 64
        $region32: #{tpu_custom_call.1} parent=27 // pred_fallthru
          _
        %s151 = sand.u32 %s49, 1
        %s152 = scalar_lea.sflag [#allocation4], %s151
        %s153 = sand.u32 %s49, 1
        %s154 = smul.addr %s153, 16
        %s155 = scalar_lea.vmem [#allocation7], %s154
        // Predicated region
        $region33: #{tpu_custom_call.1} parent=27 // pred_check
          %p156 = pneg %p62
        $region34: #{tpu_custom_call.1} parent=27 // pred_check_branch
          %158 = sbr.rel (%p156) target = $region36
        $region35: #{tpu_custom_call.1} parent=27 // pred_region
          %160 = dma.done %s152, 256
        $region36: #{tpu_custom_call.1} parent=27 // pred_fallthru
          _
        %161 = sfence
        %p162 = pneg %p36
        %p163 = pneg %p33
        %s164 = sand.u32 %s49, 1
        %s165 = scalar_lea.sflag [#allocation4], %s164
        %s166 = sand.u32 %s49, 1
        %s167 = smul.addr %s166, 16
        %s168 = scalar_lea.vmem [#allocation7], %s167
        %p169 = pneg %p62
        %p170 = pneg %p59
        %p171 = pneg %p88
        %p172 = pneg %p85
        %s173 = sand.u32 %s75, 1
        %s174 = scalar_lea.sflag [#allocation5], %s173
        %s175 = sand.u32 %s75, 1
        %s176 = smul.addr %s175, 16
        %s177 = scalar_lea.vmem [#allocation8], %s176
        %vm178 = vcmask 139264
        %179 = vst.msk [vmem:[#allocation2] sm:$0x1] %vm178, 0.0
        %180 = vst.msk [vmem:[#allocation2 + $0x11] sm:$0x1] %vm178, 0.0
        %vm181 = vcmask 7168
        %182 = vst.msk [vmem:[#allocation2 + $0x1] sm:$0xff] %vm181, 0.0
        %183 = vst.msk [vmem:[#allocation2 + $0x9] sm:$0xff] %vm181, 0.0
        %vm184 = vcmask 146568
        %185 = vst.msk [vmem:[#allocation2 + $0x1] sm:$0xff] %vm184, 0.0
        %186 = vst.msk [vmem:[#allocation2 + $0x9] sm:$0xff] %vm184, 0.0
        %v187 = vld [vmem:[%s155] sm:$0xff]
        %v188 = vld [vmem:[%s155 + $0x8] sm:$0xff]
        %191 = vrot.lane.b32.xlu0 %v187, 1
        %v192 = vpop.permute.xlu0 %191
        %193 = vrot.lane.b32.xlu0 %v188, 1
        %v194 = vpop.permute.xlu0 %193
        %vm197 = vcmask 138248
        %198 = vst.msk [vmem:[#allocation2 + $0x1] sm:$0xff] %vm197, %v192
        %199 = vst.msk [vmem:[#allocation2 + $0x9] sm:$0xff] %vm197, %v194
        %s200 = sld [smem:[#allocation3]]
        %v201 = vld [vmem:[#allocation2] sm:$0xff]
        %v202 = vld [vmem:[#allocation2 + $0x8] sm:$0xff]
        %v203 = vstv %s200
        %v204 = vmul.f32 %v203, %v201
        %v205 = vmul.f32 %v203, %v202
        %s206 = sld [smem:[#allocation3 + $0x1]]
        %v207 = vstv %s206
        %v208 = vmul.f32 %v207, %v201
        %v209 = vmul.f32 %v207, %v202
        %212 = vrot.lane.b32.xlu0 %v208, 127
        %v213 = vpop.permute.xlu0 %212
        %214 = vrot.lane.b32.xlu0 %v209, 127
        %v215 = vpop.permute.xlu0 %214
        %v218 = vadd.f32 %v204, %v213
        %v219 = vadd.f32 %v205, %v215
        %s220 = sld [smem:[#allocation3 + $0x2]]
        %v221 = vstv %s220
        %v222 = vmul.f32 %v221, %v201
        %v223 = vmul.f32 %v221, %v202
        %226 = vrot.lane.b32.xlu0 %v222, 126
        %v227 = vpop.permute.xlu0 %226
        %228 = vrot.lane.b32.xlu0 %v223, 126
        %v229 = vpop.permute.xlu0 %228
        %v232 = vadd.f32 %v218, %v227
        %v233 = vadd.f32 %v219, %v229
        %s234 = sld [smem:[#allocation3 + $0x80]]
        %v235 = vld [vmem:[#allocation2 + $0x1] sm:$0xff]
        %v236 = vld [vmem:[#allocation2 + $0x9] sm:$0xff]
        %v237 = vstv %s234
        %v238 = vmul.f32 %v237, %v235
        %v239 = vmul.f32 %v237, %v236
        %v240 = vadd.f32 %v232, %v238
        %v241 = vadd.f32 %v233, %v239
        %s242 = sld [smem:[#allocation3 + $0x81]]
        %v243 = vstv %s242
        %v244 = vmul.f32 %v243, %v235
        %v245 = vmul.f32 %v243, %v236
        %248 = vrot.lane.b32.xlu0 %v244, 127
        %v249 = vpop.permute.xlu0 %248
        %250 = vrot.lane.b32.xlu0 %v245, 127
        %v251 = vpop.permute.xlu0 %250
        %v254 = vadd.f32 %v240, %v249
        %v255 = vadd.f32 %v241, %v251
        %s256 = sld [smem:[#allocation3 + $0x82]]
        %v257 = vstv %s256
        %v258 = vmul.f32 %v257, %v235
        %v259 = vmul.f32 %v257, %v236
        %262 = vrot.lane.b32.xlu0 %v258, 126
        %v263 = vpop.permute.xlu0 %262
        %264 = vrot.lane.b32.xlu0 %v259, 126
        %v265 = vpop.permute.xlu0 %264
        %v268 = vadd.f32 %v254, %v263
        %v269 = vadd.f32 %v255, %v265
        %s270 = sld [smem:[#allocation3 + $0x100]]
        %v271 = vld [vmem:[#allocation2 + $0x2] sm:$0xff]
        %v272 = vld [vmem:[#allocation2 + $0xa] sm:$0xff]
        %v273 = vstv %s270
        %v274 = vmul.f32 %v273, %v271
        %v275 = vmul.f32 %v273, %v272
        %v276 = vadd.f32 %v268, %v274
        %v277 = vadd.f32 %v269, %v275
        %s278 = sld [smem:[#allocation3 + $0x101]]
        %v279 = vstv %s278
        %v280 = vmul.f32 %v279, %v271
        %v281 = vmul.f32 %v279, %v272
        %284 = vrot.lane.b32.xlu0 %v280, 127
        %v285 = vpop.permute.xlu0 %284
        %286 = vrot.lane.b32.xlu0 %v281, 127
        %v287 = vpop.permute.xlu0 %286
        %v290 = vadd.f32 %v276, %v285
        %v291 = vadd.f32 %v277, %v287
        %s292 = sld [smem:[#allocation3 + $0x102]]
        %v293 = vstv %s292
        %v294 = vmul.f32 %v293, %v271
        %v295 = vmul.f32 %v293, %v272
        %298 = vrot.lane.b32.xlu0 %v294, 126
        %v299 = vpop.permute.xlu0 %298
        %300 = vrot.lane.b32.xlu0 %v295, 126
        %v301 = vpop.permute.xlu0 %300
        %v304 = vadd.f32 %v290, %v299
        %v305 = vadd.f32 %v291, %v301
        %vm306 = vcmask 130048
        %307 = vst.msk [vmem:[%s177] sm:$0xff] %vm306, %v304
        %308 = vst.msk [vmem:[%s177 + $0x8] sm:$0xff] %vm306, %v305
        %s309 = sand.u32 %s75, 1
        %s310 = scalar_lea.sflag [#allocation5], %s309
        %s311 = sand.u32 %s75, 1
        %s312 = smul.addr %s311, 16
        %s313 = scalar_lea.vmem [#allocation8], %s312
        // Predicated region
        $region37: #{tpu_custom_call.1} parent=27 // pred_check
          %p314 = pneg %p85
        $region38: #{tpu_custom_call.1} parent=27 // pred_check_branch
          %316 = sbr.rel (%p314) target = $region40
        $region39: #{tpu_custom_call.1} parent=27 // pred_region
          %318 = vsyncadd %s310, 0
          %s319 = smul.addr %s20, 2
          %s320 = smul.addr %s319, 8
          %s321 = scalar_lea.hbm %s2, %s320
          %s322 = sshll.u32 %s313, 4
          %s323 = int_to_ptr.vmem [resolvable:$true] %s322
          %s324 = sshll.u32 %s321, 4
          %s325 = int_to_ptr.hbm [resolvable:$true] %s324
          %330 = dma.vmem_to_hbm [thread:$0]  %s323, 256, %s325, %s310, 128, 128, 8
        $region40: #{tpu_custom_call.1} parent=27 // pred_fallthru
          _
      $region28: #{tpu_custom_call.1} parent=5 // pred_fallthru
        _
      %p331 = scmp.le.s32.totalorder 2, %s15
      // Predicated region
      $region41: #{tpu_custom_call.1} parent=5 // pred_check
        %p332 = pneg %p331
      $region42: #{tpu_custom_call.1} parent=5 // pred_check_branch
        %334 = sbr.rel (%p332) target = $region44
      $region43: #{tpu_custom_call.1} parent=5 // pred_region
        %s335 = ssub.s32 %s15, 2
        // Predicated region
        $region45: #{tpu_custom_call.1} parent=43 // pred_check
          %p336 = pneg %p91
        $region46: #{tpu_custom_call.1} parent=43 // pred_check_branch
          %338 = sbr.rel (%p336) target = $region48
        $region47: #{tpu_custom_call.1} parent=43 // pred_region
          %s339 = sand.u32 %s76, 1
          %s340 = scalar_lea.sflag [#allocation5], %s339
          %s341 = sand.u32 %s76, 1
          %s342 = smul.addr %s341, 16
          %s343 = scalar_lea.vmem [#allocation8], %s342
          %345 = dma.done %s340, 256
        $region48: #{tpu_custom_call.1} parent=43 // pred_fallthru
          _
      $region44: #{tpu_custom_call.1} parent=5 // pred_fallthru
        _
    $region6: #{tpu_custom_call.1} parent=1 // loop_footer
      %s19 = sadd.s32 1, %s15
    $region7: #{tpu_custom_call.1} parent=1 // loop_footer_branch
      %14 = sbr.rel target = $region3
    $region8: #{tpu_custom_call.1} parent=1 // loop_exit
      _
    %346 = vsyncpa [#allocation4], 1
    %s347 = scalar_lea.sflag [#allocation4], 1
    %348 = vsyncpa %s347, 1
    %349 = vsyncpa [#allocation5], 1
    %s350 = scalar_lea.sflag [#allocation5], 1
    %351 = vsyncpa %s350, 1
    %352 = vsyncpa [#allocation6], 1
    %s353 = scalar_lea.sflag [#allocation6], 1
    %354 = vsyncpa %s353, 1

</llo_original>
